<compile_context>
chip_gen: v6e
topology: v6e:2x2x1
jax: 0.10.0
libtpu: 0.0.40
codegen_flags: <defaults>
</compile_context>

<pallas_src>
import functools

import jax
import jax.numpy as jnp
from jax import lax
from jax.experimental import pallas as pl
from jax.experimental.pallas import tpu as pltpu


def _round_up(x, m):
    return ((x + m - 1) // m) * m


def critic_kernel(x_ref, w1_ref, b1_ref, w2_ref, b2_ref, w3_ref, b3_ref, o_ref,
                  *, act_dtype):
    """Fused 3-layer MLP: two tanh hidden layers + linear head, all in VMEM.

    MXU operands are bf16 with f32 accumulation; tanh runs in `act_dtype`
    (bf16 on v6e/v7x where the VPU/EUP support it, f32 on v5e and older).
    """
    x = x_ref[...].astype(jnp.bfloat16)
    z1 = jnp.dot(x, w1_ref[...], preferred_element_type=jnp.float32) + b1_ref[...]
    h1 = jnp.tanh(z1.astype(act_dtype)).astype(jnp.bfloat16)
    z2 = jnp.dot(h1, w2_ref[...], preferred_element_type=jnp.float32) + b2_ref[...]
    h2 = jnp.tanh(z2.astype(act_dtype)).astype(jnp.bfloat16)
    # Value head: w3 is a [1, h2] row; contracting the feature axis of BOTH operands
    # gives a lane-dense [1, tb] row straight from the MXU (unmasked full-lane vst).
    v = lax.dot_general(
        w3_ref[...], h2,
        dimension_numbers=(((1,), (1,)), ((), ())),
        preferred_element_type=jnp.float32,
    )
    v = v + b3_ref[0]  # scalar bias from SMEM
    o_ref[...] = v.reshape(o_ref.shape).astype(o_ref.dtype)


@functools.partial(jax.jit, static_argnames=("tile_b", "bf16_act"))
def _critic_forward_impl(obs, params, *, tile_b, bf16_act):
    B, obs_dim = obs.shape
    h1d = params["w1"].shape[1]
    h2d = params["w2"].shape[1]

    # Batch tile: as few grid steps as possible (kernel is overhead/latency-bound,
    # nowhere near VMEM limits).  Multiple of 128 when B >= 128 (lane-dense stores,
    # MXU-row alignment); multiple of 8 (sublane) only for tiny batches.
    align = 128 if B >= 128 else 8
    tb = max(align, min(_round_up(tile_b, align), _round_up(B, align)))
    Bp = _round_up(B, tb)
    num_tiles = Bp // tb
    # NOTE: for very large ragged B a masked tail tile would avoid this extra HBM
    # pass; at these sizes the pad is negligible.
    obs_p = obs if Bp == B else jnp.pad(obs, ((0, Bp - B), (0, 0)))

    # Weight layout: [in, out] for hidden layers, [1, h2] row for the head.
    # bf16 MXU operands cast once here (resident in VMEM, DMA'd once).
    w1 = params["w1"].astype(jnp.bfloat16)
    w2 = params["w2"].astype(jnp.bfloat16)
    w3_row = params["w3"].reshape(h2d, 1).T.astype(jnp.bfloat16)       # [1, h2]
    b1 = params["b1"].reshape(1, h1d).astype(jnp.float32)
    b2 = params["b2"].reshape(1, h2d).astype(jnp.float32)
    b3 = params["b3"].reshape(1).astype(jnp.float32)                   # SMEM scalar

    # Resident params: constant index_map (fetched once) + single buffer to trim
    # the pipeline prologue and drop the unused second buffer per param.
    def resident(shape):
        return pl.BlockSpec(shape, lambda i: (0, 0), pipeline_mode=pl.Buffered(1))

    flops = 2 * Bp * (obs_dim * h1d + h1d * h2d + h2d)
    transcendentals = Bp * (h1d + h2d)
    bytes_accessed = (
        Bp * obs_dim * obs_p.dtype.itemsize                  # obs stream
        + 2 * (obs_dim * h1d + h1d * h2d + h2d)              # bf16 weights
        + 4 * (h1d + h2d + 1)                                 # f32 biases
        + 4 * Bp                                              # f32 output
    )

    kernel = functools.partial(
        critic_kernel,
        act_dtype=jnp.bfloat16 if bf16_act else jnp.float32,
    )

    out = pl.pallas_call(
        kernel,
        out_shape=jax.ShapeDtypeStruct((num_tiles, 1, tb), jnp.float32),
        grid_spec=pltpu.PrefetchScalarGridSpec(
            num_scalar_prefetch=0,
            grid=(num_tiles,),
            in_specs=[
                pl.BlockSpec((tb, obs_dim), lambda i: (i, 0)),       # obs batch tile
                resident((obs_dim, h1d)),                            # w1
                resident((1, h1d)),                                  # b1
                resident((h1d, h2d)),                                # w2
                resident((1, h2d)),                                  # b2
                resident((1, h2d)),                                  # w3 row
                pl.BlockSpec(memory_space=pltpu.MemorySpace.SMEM),   # b3 scalar
            ],
            out_specs=pl.BlockSpec((1, 1, tb), lambda i: (i, 0, 0)),  # lane-dense row
        ),
        compiler_params=pltpu.CompilerParams(
            dimension_semantics=("parallel",),
        ),
        cost_estimate=pl.CostEstimate(
            flops=flops,
            transcendentals=transcendentals,
            bytes_accessed=bytes_accessed,
        ),
    )(obs_p, w1, b1, w2, b2, w3_row, b3)

    # torch.squeeze(..., -1) equivalent + strip batch padding (wrapper glue).
    return out.reshape(-1)[:B]


def critic_forward(obs, params, *, tile_b=512, bf16_act=None):
    """obs: [B, obs_dim] (f32 or bf16). params: dict of w1,b1,w2,b2,w3,b3 ([in,out]).

    Returns value estimates of shape [B] (last dim squeezed), float32."""
    if bf16_act is None:
        kind = jax.devices()[0].device_kind.lower()
        # bf16 VPU/EUP only on v6e / v7x; keep f32 tanh elsewhere (v5e etc.).
        bf16_act = any(tag in kind for tag in ("v6", "v7", "7x"))
    return _critic_forward_impl(obs, params, tile_b=tile_b, bf16_act=bool(bf16_act))


def init_params(key, obs_dim, hidden_sizes):
    """Deterministic synthetic init. Weights stored as [in, out]."""
    sizes = [obs_dim] + list(hidden_sizes) + [1]
    params = {}
    for j in range(len(sizes) - 1):
        key, kw, kb = jax.random.split(key, 3)
        fan_in = sizes[j]
        scale = 1.0 / jnp.sqrt(jnp.float32(fan_in))
        params[f"w{j + 1}"] = (
            jax.random.uniform(kw, (sizes[j], sizes[j + 1]), jnp.float32, -1.0, 1.0)
            * scale
        )
        params[f"b{j + 1}"] = (
            jax.random.uniform(kb, (1, sizes[j + 1]), jnp.float32, -1.0, 1.0) * scale
        )
    return params


def critic_reference(obs, params):
    # Pure f32 reference (PyTorch module semantics).
    h1 = jnp.tanh(obs @ params["w1"] + params["b1"])
    h2 = jnp.tanh(h1 @ params["w2"] + params["b2"])
    v = h2 @ params["w3"] + params["b3"]
    return jnp.squeeze(v, axis=-1)


def critic_reference_emulated(obs, params, bf16_act):
    # Emulates the kernel numerics: bf16 MXU operands, f32 accumulation,
    # tanh in bf16 (v6e/v7x path) or f32 (v5e path).
    bf = jnp.bfloat16
    act = bf if bf16_act else jnp.float32
    z1 = jnp.dot(obs.astype(bf), params["w1"].astype(bf),
                 preferred_element_type=jnp.float32) + params["b1"]
    h1 = jnp.tanh(z1.astype(act)).astype(bf)
    z2 = jnp.dot(h1, params["w2"].astype(bf),
                 preferred_element_type=jnp.float32) + params["b2"]
    h2 = jnp.tanh(z2.astype(act)).astype(bf)
    v = jnp.dot(h2, params["w3"].astype(bf),
                preferred_element_type=jnp.float32) + params["b3"]
    return jnp.squeeze(v, axis=-1)


if __name__ == "__main__":
    key = jax.random.PRNGKey(0)
    obs_dim = 32
    hidden_sizes = (64, 64)   # activation = tanh (SpinningUp default)
    # TODO(synk): activation is hard-coded to tanh; other nn activations would need
    # their own elementwise branch in the kernel body.

    key, k_params = jax.random.split(key)
    params = init_params(k_params, obs_dim, hidden_sizes)

    kind = jax.devices()[0].device_kind.lower()
    bf16_act = any(tag in kind for tag in ("v6", "v7", "7x"))

    # Case 1: B=512 -> single grid step of tb=512 (128-aligned, unmasked stores).
    key, k_obs = jax.random.split(key)
    obs = jax.random.normal(k_obs, (512, obs_dim), dtype=jnp.float32)
    v = jax.block_until_ready(critic_forward(obs, params))
    assert v.shape == (512,), v.shape
    # Tight check vs. a reference emulating the kernel's bf16/f32 numerics.
    assert jnp.allclose(v, critic_reference_emulated(obs, params, bf16_act),
                        atol=2e-2, rtol=2e-2)
    # Loose check vs. the pure-f32 module semantics.
    assert jnp.allclose(v, critic_reference(obs, params), atol=5e-2, rtol=5e-2)

    # Case 2: ragged multi-tile batch (B=1280 -> 3 steps of tb=512, padded tail).
    key, k_obs2 = jax.random.split(key)
    obs2 = jax.random.normal(k_obs2, (1280, obs_dim), dtype=jnp.float32)
    v2 = jax.block_until_ready(critic_forward(obs2, params))
    assert v2.shape == (1280,), v2.shape
    assert jnp.allclose(v2, critic_reference_emulated(obs2, params, bf16_act),
                        atol=2e-2, rtol=2e-2)
    assert jnp.allclose(v2, critic_reference(obs2, params), atol=5e-2, rtol=5e-2)

    print("KERNEL_OK")
</pallas_src>

<mosaic_0001>
module attributes {stable_mosaic.version = 11 : i64} {
  func.func @critic_kernel(%arg0: i32, %arg1: memref<512x32xf32, #tpu.memory_space<vmem>>, %arg2: memref<32x64xbf16, #tpu.memory_space<vmem>>, %arg3: memref<1x64xf32, #tpu.memory_space<vmem>>, %arg4: memref<64x64xbf16, #tpu.memory_space<vmem>>, %arg5: memref<1x64xf32, #tpu.memory_space<vmem>>, %arg6: memref<1x64xbf16, #tpu.memory_space<vmem>>, %arg7: memref<1xf32, #tpu.memory_space<smem>>, %arg8: memref<1x1x512xf32, #tpu.memory_space<vmem>>) attributes {dimension_semantics = [#tpu.dimension_semantics<parallel>], iteration_bounds = array<i64: 1>, scalar_prefetch = 0 : i64, scratch_operands = 0 : i64, tpu.core_type = #tpu.core_type<tc>, window_params = [{transform_indices = @transform_0, window_bounds = array<i64: 512, 32>}, {pipeline_mode = #tpu.pipeline_mode<synchronous>, transform_indices = @transform_1, window_bounds = array<i64: 32, 64>}, {pipeline_mode = #tpu.pipeline_mode<synchronous>, transform_indices = @transform_2, window_bounds = array<i64: 1, 64>}, {pipeline_mode = #tpu.pipeline_mode<synchronous>, transform_indices = @transform_3, window_bounds = array<i64: 64, 64>}, {pipeline_mode = #tpu.pipeline_mode<synchronous>, transform_indices = @transform_4, window_bounds = array<i64: 1, 64>}, {pipeline_mode = #tpu.pipeline_mode<synchronous>, transform_indices = @transform_5, window_bounds = array<i64: 1, 64>}, {transform_indices = @transform_6, window_bounds = array<i64: 1>}, {transform_indices = @transform_7, window_bounds = array<i64: 1, 1, 512>}]} {
    %c0 = arith.constant 0 : index
    %c0_0 = arith.constant 0 : index
    %0 = vector.load %arg1[%c0, %c0_0] : memref<512x32xf32, #tpu.memory_space<vmem>>, vector<512x32xf32>
    %1 = arith.truncf %0 : vector<512x32xf32> to vector<512x32xbf16>
    %c0_1 = arith.constant 0 : index
    %c0_2 = arith.constant 0 : index
    %2 = vector.load %arg2[%c0_1, %c0_2] : memref<32x64xbf16, #tpu.memory_space<vmem>>, vector<32x64xbf16>
    %cst = arith.constant dense<0.000000e+00> : vector<512x64xf32>
    %3 = tpu.matmul %1, %2, %cst {dimension_numbers = #tpu.dot_dimension_numbers<[1], [0], [0], [1], [0, 0, 1, 1], [], []>} : vector<512x32xbf16>, vector<32x64xbf16>, vector<512x64xf32> -> vector<512x64xf32>
    %c0_3 = arith.constant 0 : index
    %c0_4 = arith.constant 0 : index
    %4 = vector.load %arg3[%c0_3, %c0_4] : memref<1x64xf32, #tpu.memory_space<vmem>>, vector<1x64xf32>
    %5 = vector.broadcast %4 : vector<1x64xf32> to vector<512x64xf32>
    %6 = arith.addf %3, %5 : vector<512x64xf32>
    %7 = math.tanh %6 : vector<512x64xf32>
    %8 = arith.truncf %7 : vector<512x64xf32> to vector<512x64xbf16>
    %c0_5 = arith.constant 0 : index
    %c0_6 = arith.constant 0 : index
    %9 = vector.load %arg4[%c0_5, %c0_6] : memref<64x64xbf16, #tpu.memory_space<vmem>>, vector<64x64xbf16>
    %cst_7 = arith.constant dense<0.000000e+00> : vector<512x64xf32>
    %10 = tpu.matmul %8, %9, %cst_7 {dimension_numbers = #tpu.dot_dimension_numbers<[1], [0], [0], [1], [0, 0, 1, 1], [], []>} : vector<512x64xbf16>, vector<64x64xbf16>, vector<512x64xf32> -> vector<512x64xf32>
    %c0_8 = arith.constant 0 : index
    %c0_9 = arith.constant 0 : index
    %11 = vector.load %arg5[%c0_8, %c0_9] : memref<1x64xf32, #tpu.memory_space<vmem>>, vector<1x64xf32>
    %12 = vector.broadcast %11 : vector<1x64xf32> to vector<512x64xf32>
    %13 = arith.addf %10, %12 : vector<512x64xf32>
    %14 = math.tanh %13 : vector<512x64xf32>
    %15 = arith.truncf %14 : vector<512x64xf32> to vector<512x64xbf16>
    %c0_10 = arith.constant 0 : index
    %c0_11 = arith.constant 0 : index
    %16 = vector.load %arg6[%c0_10, %c0_11] : memref<1x64xbf16, #tpu.memory_space<vmem>>, vector<1x64xbf16>
    %cst_12 = arith.constant dense<0.000000e+00> : vector<1x512xf32>
    %17 = tpu.matmul %16, %15, %cst_12 {dimension_numbers = #tpu.dot_dimension_numbers<[1], [1], [0], [0], [0, 0, 1, 0], [], []>} : vector<1x64xbf16>, vector<512x64xbf16>, vector<1x512xf32> -> vector<1x512xf32>
    %c0_13 = arith.constant 0 : index
    %18 = memref.load %arg7[%c0_13] : memref<1xf32, #tpu.memory_space<smem>>
    %19 = vector.broadcast %18 : f32 to vector<1x512xf32>
    %20 = arith.addf %17, %19 : vector<1x512xf32>
    %21 = vector.shape_cast %20 : vector<1x512xf32> to vector<1x1x512xf32>
    %c0_14 = arith.constant 0 : index
    %c0_15 = arith.constant 0 : index
    %c0_16 = arith.constant 0 : index
    %22 = vector.load %arg8[%c0_14, %c0_15, %c0_16] : memref<1x1x512xf32, #tpu.memory_space<vmem>>, vector<1x1x512xf32>
    tpu.vector_store %arg8[%c0_14, %c0_15, %c0_16], %21 {strides = array<i32>} : memref<1x1x512xf32, #tpu.memory_space<vmem>>, vector<1x1x512xf32>,
    return
  }
  func.func @transform_0(%arg0: i32) -> (i32, i32) {
    %c0_i32 = arith.constant 0 : i32
    %c0_i32_0 = arith.constant 0 : i32
    return %arg0, %c0_i32 : i32, i32
  }
  func.func @transform_1(%arg0: i32) -> (i32, i32) {
    %c0_i32 = arith.constant 0 : i32
    %c0_i32_0 = arith.constant 0 : i32
    %c0_i32_1 = arith.constant 0 : i32
    return %c0_i32, %c0_i32_0 : i32, i32
  }
  func.func @transform_2(%arg0: i32) -> (i32, i32) {
    %c0_i32 = arith.constant 0 : i32
    %c0_i32_0 = arith.constant 0 : i32
    %c0_i32_1 = arith.constant 0 : i32
    return %c0_i32, %c0_i32_0 : i32, i32
  }
  func.func @transform_3(%arg0: i32) -> (i32, i32) {
    %c0_i32 = arith.constant 0 : i32
    %c0_i32_0 = arith.constant 0 : i32
    %c0_i32_1 = arith.constant 0 : i32
    return %c0_i32, %c0_i32_0 : i32, i32
  }
  func.func @transform_4(%arg0: i32) -> (i32, i32) {
    %c0_i32 = arith.constant 0 : i32
    %c0_i32_0 = arith.constant 0 : i32
    %c0_i32_1 = arith.constant 0 : i32
    return %c0_i32, %c0_i32_0 : i32, i32
  }
  func.func @transform_5(%arg0: i32) -> (i32, i32) {
    %c0_i32 = arith.constant 0 : i32
    %c0_i32_0 = arith.constant 0 : i32
    %c0_i32_1 = arith.constant 0 : i32
    return %c0_i32, %c0_i32_0 : i32, i32
  }
  func.func @transform_6(%arg0: i32) -> i32 {
    %c0_i32 = arith.constant 0 : i32
    %c0_i32_0 = arith.constant 0 : i32
    return %c0_i32 : i32
  }
  func.func @transform_7(%arg0: i32) -> (i32, i32, i32) {
    %c0_i32 = arith.constant 0 : i32
    %c0_i32_0 = arith.constant 0 : i32
    %c0_i32_1 = arith.constant 0 : i32
    return %arg0, %c0_i32, %c0_i32_0 : i32, i32, i32
  }
}

</mosaic_0001>

<llo_original>
// kernel: _critic_forward_impl.1
$region0: #{_critic_forward_impl.1}
  #allocation0 [shape = 'u32[]', space=smem, size = 0x4, offset = 0x4, fixed_abs, tag = 'smem constant byte address 0x4 - core index']
  #allocation1 [shape = 'u32[144,128]{1,0:T(1,128)}', space=vmem, size = 0x12000, scoped, tag = 'internal scratch']
  #allocation2 [shape = 'f32[1]{0:T(128)S(6)}', space=smem, size = 0x200, scoped, tag = 'scoped memory for _critic_forward_impl.1']
  %s0 = inlined_call_operand.vmem [shape: f32[512,32], index: 0, kind: input, shape index: {}]
  %s1 = inlined_call_operand.vmem [shape: bf16[32,64], index: 1, kind: input, shape index: {}]
  %s2 = inlined_call_operand.vmem [shape: f32[1,64], index: 2, kind: input, shape index: {}]
  %s3 = inlined_call_operand.vmem [shape: bf16[64,64], index: 3, kind: input, shape index: {}]
  %s4 = inlined_call_operand.vmem [shape: f32[1,64], index: 4, kind: input, shape index: {}]
  %s5 = inlined_call_operand.vmem [shape: bf16[1,64], index: 5, kind: input, shape index: {}]
  %s6 = inlined_call_operand.<no memory space> [shape: f32[1], index: 6, kind: input, shape index: {}]
  %s7 = inlined_call_operand.hbm [shape: f32[1,1,512], index: 7, kind: output, shape index: {}]
  %s8 = sld [smem:[#allocation0]]
  $region38: #{_critic_forward_impl.1} parent=0
    _
  %s10 = ssub.s32 1, %s8
  %s11 = scalar_select 0, %s10, %s8
  %12 = sst [smem:[#allocation2]] %s6
  $region1: #{_critic_forward_impl.1} parent=0
    #allocation3 [shape = 'u8[2048]{0}', space=vmem, size = 0x800, scoped, tag = 'output window, operand 0, single buffered']
    #allocation4 [shape = 's32[1]{0}', space=sflag, size = 0x4, scoped, tag = 'scoped memory for _critic_forward_impl.1']
    %13 = vsyncpa [#allocation4], 0
    // Predicated region
    $region2: #{_critic_forward_impl.1} parent=1 // pred_check
      _
    $region3: #{_critic_forward_impl.1} parent=1 // pred_check_branch
      %15 = sbr.rel (0) target = $region5
    $region4: #{_critic_forward_impl.1} parent=1 // pred_region
      _
    $region5: #{_critic_forward_impl.1} parent=1 // pred_fallthru
      _
    // Predicated region
    $region6: #{_critic_forward_impl.1} parent=1 // pred_check
      _
    $region7: #{_critic_forward_impl.1} parent=1 // pred_check_branch
      %17 = sbr.rel (0) target = $region9
    $region8: #{_critic_forward_impl.1} parent=1 // pred_region
      _
    $region9: #{_critic_forward_impl.1} parent=1 // pred_fallthru
      _
    // Predicated region
    $region10: #{_critic_forward_impl.1} parent=1 // pred_check
      _
    $region11: #{_critic_forward_impl.1} parent=1 // pred_check_branch
      %19 = sbr.rel (0) target = $region13
    $region12: #{_critic_forward_impl.1} parent=1 // pred_region
      _
    $region13: #{_critic_forward_impl.1} parent=1 // pred_fallthru
      _
    // Predicated region
    $region14: #{_critic_forward_impl.1} parent=1 // pred_check
      _
    $region15: #{_critic_forward_impl.1} parent=1 // pred_check_branch
      %21 = sbr.rel (0) target = $region17
    $region16: #{_critic_forward_impl.1} parent=1 // pred_region
      _
    $region17: #{_critic_forward_impl.1} parent=1 // pred_fallthru
      _
    // Predicated region
    $region18: #{_critic_forward_impl.1} parent=1 // pred_check
      _
    $region19: #{_critic_forward_impl.1} parent=1 // pred_check_branch
      %23 = sbr.rel (0) target = $region21
    $region20: #{_critic_forward_impl.1} parent=1 // pred_region
      _
    $region21: #{_critic_forward_impl.1} parent=1 // pred_fallthru
      _
    // Predicated region
    $region22: #{_critic_forward_impl.1} parent=1 // pred_check
      _
    $region23: #{_critic_forward_impl.1} parent=1 // pred_check_branch
      %25 = sbr.rel (0) target = $region25
    $region24: #{_critic_forward_impl.1} parent=1 // pred_region
      _
    $region25: #{_critic_forward_impl.1} parent=1 // pred_fallthru
      _
    // Predicated region
    $region26: #{_critic_forward_impl.1} parent=1 // pred_check
      _
    $region27: #{_critic_forward_impl.1} parent=1 // pred_check_branch
      %27 = sbr.rel (0) target = $region29
    $region28: #{_critic_forward_impl.1} parent=1 // pred_region
      _
    $region29: #{_critic_forward_impl.1} parent=1 // pred_fallthru
      _
    %v29 = vld [vmem:[%s0] sm:$0xff]
    %v30 = vld [vmem:[%s0 + $0x8] sm:$0xff]
    %v31 = vld [vmem:[%s0 + $0x10] sm:$0xff]
    %v32 = vld [vmem:[%s0 + $0x18] sm:$0xff]
    %v33 = vld [vmem:[%s0 + $0x20] sm:$0xff]
    %v34 = vld [vmem:[%s0 + $0x28] sm:$0xff]
    %v35 = vld [vmem:[%s0 + $0x30] sm:$0xff]
    %v36 = vld [vmem:[%s0 + $0x38] sm:$0xff]
    %v37 = vld [vmem:[%s0 + $0x40] sm:$0xff]
    %v38 = vld [vmem:[%s0 + $0x48] sm:$0xff]
    %v39 = vld [vmem:[%s0 + $0x50] sm:$0xff]
    %v40 = vld [vmem:[%s0 + $0x58] sm:$0xff]
    %v41 = vld [vmem:[%s0 + $0x60] sm:$0xff]
    %v42 = vld [vmem:[%s0 + $0x68] sm:$0xff]
    %v43 = vld [vmem:[%s0 + $0x70] sm:$0xff]
    %v44 = vld [vmem:[%s0 + $0x78] sm:$0xff]
    %v45 = vld [vmem:[%s0 + $0x80] sm:$0xff]
    %v46 = vld [vmem:[%s0 + $0x88] sm:$0xff]
    %v47 = vld [vmem:[%s0 + $0x90] sm:$0xff]
    %v48 = vld [vmem:[%s0 + $0x98] sm:$0xff]
    %v49 = vld [vmem:[%s0 + $0xa0] sm:$0xff]
    %v50 = vld [vmem:[%s0 + $0xa8] sm:$0xff]
    %v51 = vld [vmem:[%s0 + $0xb0] sm:$0xff]
    %v52 = vld [vmem:[%s0 + $0xb8] sm:$0xff]
    %v53 = vld [vmem:[%s0 + $0xc0] sm:$0xff]
    %v54 = vld [vmem:[%s0 + $0xc8] sm:$0xff]
    %v55 = vld [vmem:[%s0 + $0xd0] sm:$0xff]
    %v56 = vld [vmem:[%s0 + $0xd8] sm:$0xff]
    %v57 = vld [vmem:[%s0 + $0xe0] sm:$0xff]
    %v58 = vld [vmem:[%s0 + $0xe8] sm:$0xff]
    %v59 = vld [vmem:[%s0 + $0xf0] sm:$0xff]
    %v60 = vld [vmem:[%s0 + $0xf8] sm:$0xff]
    %v61 = vld [vmem:[%s0 + $0x100] sm:$0xff]
    %v62 = vld [vmem:[%s0 + $0x108] sm:$0xff]
    %v63 = vld [vmem:[%s0 + $0x110] sm:$0xff]
    %v64 = vld [vmem:[%s0 + $0x118] sm:$0xff]
    %v65 = vld [vmem:[%s0 + $0x120] sm:$0xff]
    %v66 = vld [vmem:[%s0 + $0x128] sm:$0xff]
    %v67 = vld [vmem:[%s0 + $0x130] sm:$0xff]
    %v68 = vld [vmem:[%s0 + $0x138] sm:$0xff]
    %v69 = vld [vmem:[%s0 + $0x140] sm:$0xff]
    %v70 = vld [vmem:[%s0 + $0x148] sm:$0xff]
    %v71 = vld [vmem:[%s0 + $0x150] sm:$0xff]
    %v72 = vld [vmem:[%s0 + $0x158] sm:$0xff]
    %v73 = vld [vmem:[%s0 + $0x160] sm:$0xff]
    %v74 = vld [vmem:[%s0 + $0x168] sm:$0xff]
    %v75 = vld [vmem:[%s0 + $0x170] sm:$0xff]
    %v76 = vld [vmem:[%s0 + $0x178] sm:$0xff]
    %v77 = vld [vmem:[%s0 + $0x180] sm:$0xff]
    %v78 = vld [vmem:[%s0 + $0x188] sm:$0xff]
    %v79 = vld [vmem:[%s0 + $0x190] sm:$0xff]
    %v80 = vld [vmem:[%s0 + $0x198] sm:$0xff]
    %v81 = vld [vmem:[%s0 + $0x1a0] sm:$0xff]
    %v82 = vld [vmem:[%s0 + $0x1a8] sm:$0xff]
    %v83 = vld [vmem:[%s0 + $0x1b0] sm:$0xff]
    %v84 = vld [vmem:[%s0 + $0x1b8] sm:$0xff]
    %v85 = vld [vmem:[%s0 + $0x1c0] sm:$0xff]
    %v86 = vld [vmem:[%s0 + $0x1c8] sm:$0xff]
    %v87 = vld [vmem:[%s0 + $0x1d0] sm:$0xff]
    %v88 = vld [vmem:[%s0 + $0x1d8] sm:$0xff]
    %v89 = vld [vmem:[%s0 + $0x1e0] sm:$0xff]
    %v90 = vld [vmem:[%s0 + $0x1e8] sm:$0xff]
    %v91 = vld [vmem:[%s0 + $0x1f0] sm:$0xff]
    %v92 = vld [vmem:[%s0 + $0x1f8] sm:$0xff]
    %v93 = vpack.c.bf16 %v30, %v29
    %v94 = vpack.c.bf16 %v32, %v31
    %v95 = vpack.c.bf16 %v34, %v33
    %v96 = vpack.c.bf16 %v36, %v35
    %v97 = vpack.c.bf16 %v38, %v37
    %v98 = vpack.c.bf16 %v40, %v39
    %v99 = vpack.c.bf16 %v42, %v41
    %v100 = vpack.c.bf16 %v44, %v43
    %v101 = vpack.c.bf16 %v46, %v45
    %v102 = vpack.c.bf16 %v48, %v47
    %v103 = vpack.c.bf16 %v50, %v49
    %v104 = vpack.c.bf16 %v52, %v51
    %v105 = vpack.c.bf16 %v54, %v53
    %v106 = vpack.c.bf16 %v56, %v55
    %v107 = vpack.c.bf16 %v58, %v57
    %v108 = vpack.c.bf16 %v60, %v59
    %v109 = vpack.c.bf16 %v62, %v61
    %v110 = vpack.c.bf16 %v64, %v63
    %v111 = vpack.c.bf16 %v66, %v65
    %v112 = vpack.c.bf16 %v68, %v67
    %v113 = vpack.c.bf16 %v70, %v69
    %v114 = vpack.c.bf16 %v72, %v71
    %v115 = vpack.c.bf16 %v74, %v73
    %v116 = vpack.c.bf16 %v76, %v75
    %v117 = vpack.c.bf16 %v78, %v77
    %v118 = vpack.c.bf16 %v80, %v79
    %v119 = vpack.c.bf16 %v82, %v81
    %v120 = vpack.c.bf16 %v84, %v83
    %v121 = vpack.c.bf16 %v86, %v85
    %v122 = vpack.c.bf16 %v88, %v87
    %v123 = vpack.c.bf16 %v90, %v89
    %v124 = vpack.c.bf16 %v92, %v91
    %v125 = vld [vmem:[%s1] sm:$0xf]
    %v126 = vld [vmem:[%s1 + $0x4] sm:$0xf]
    %v127 = vld [vmem:[%s1 + $0x8] sm:$0xf]
    %v128 = vld [vmem:[%s1 + $0xc] sm:$0xf]
    %v129 = vld [vmem:[%s2] sm:$0x1]
    %v131 = vlaneseq
    %v132 = vshrl.u32 %v131, 7
    %v133 = vsub.s32 0, %v132
    %v134 = vrot.slane %v129, %v133
    %v140 = vunpack.c.l.b16 %v125
    %v141 = vunpack.c.l.b16 %v126
    %v142 = vunpack.c.l.b16 %v127
    %v143 = vunpack.c.l.b16 %v128
    %v144 = vpack.c.b16 %v141, %v140
    %v145 = vpack.c.b16 %v143, %v142
    %vm148 = vcmask 261120
    %v150 = vsel %vm148, %v93, 0
    %v153 = vsel %vm148, %v94, 0
    %v156 = vsel %vm148, %v95, 0
    %v159 = vsel %vm148, %v96, 0
    %v162 = vsel %vm148, %v97, 0
    %v165 = vsel %vm148, %v98, 0
    %v168 = vsel %vm148, %v99, 0
    %v171 = vsel %vm148, %v100, 0
    %v174 = vsel %vm148, %v101, 0
    %v177 = vsel %vm148, %v102, 0
    %v180 = vsel %vm148, %v103, 0
    %v183 = vsel %vm148, %v104, 0
    %v186 = vsel %vm148, %v105, 0
    %v189 = vsel %vm148, %v106, 0
    %v192 = vsel %vm148, %v107, 0
    %v195 = vsel %vm148, %v108, 0
    %v198 = vsel %vm148, %v109, 0
    %v201 = vsel %vm148, %v110, 0
    %v204 = vsel %vm148, %v111, 0
    %v207 = vsel %vm148, %v112, 0
    %v210 = vsel %vm148, %v113, 0
    %v213 = vsel %vm148, %v114, 0
    %v216 = vsel %vm148, %v115, 0
    %v219 = vsel %vm148, %v116, 0
    %v222 = vsel %vm148, %v117, 0
    %v225 = vsel %vm148, %v118, 0
    %v228 = vsel %vm148, %v119, 0
    %v231 = vsel %vm148, %v120, 0
    %v234 = vsel %vm148, %v121, 0
    %v237 = vsel %vm148, %v122, 0
    %v240 = vsel %vm148, %v123, 0
    %v243 = vsel %vm148, %v124, 0
    %245 = vmatprep.subr.bf16.mxu0 0
    %246 = vmatpush1.bf16.msra.mxu0 0
    %247 = vmatprep.subr.bf16.mxu0 0
    %248 = vmatpush1.bf16.msra.mxu0 0
    %249 = vmatprep.subr.bf16.mxu0 0
    %250 = vmatpush1.bf16.msra.mxu0 0
    %251 = vmatprep.subr.bf16.mxu0 0
    %252 = vmatpush1.bf16.msra.mxu0 0
    %253 = vmatprep.subr.bf16.mxu0 0
    %254 = vmatpush1.bf16.msra.mxu0 0
    %255 = vmatprep.subr.bf16.mxu0 0
    %256 = vmatpush1.bf16.msra.mxu0 0
    %257 = vmatprep.subr.bf16.mxu0 0
    %258 = vmatpush1.bf16.msra.mxu0 %v145
    %259 = vmatprep.subr.bf16.mxu0 0
    %260 = vmatpush1.bf16.msra.mxu0 %v144
    %261 = vmatprep.subr.bf16.mxu0 0
    %262 = vmatpush2.bf16.msra.mxu0 0
    %263 = vmatprep.subr.bf16.mxu0 0
    %264 = vmatpush2.bf16.msra.mxu0 0
    %265 = vmatprep.subr.bf16.mxu0 0
    %266 = vmatpush2.bf16.msra.mxu0 0
    %267 = vmatprep.subr.bf16.mxu0 0
    %268 = vmatpush2.bf16.msra.mxu0 0
    %269 = vmatprep.subr.bf16.mxu0 0
    %270 = vmatpush2.bf16.msra.mxu0 0
    %271 = vmatprep.subr.bf16.mxu0 0
    %272 = vmatpush2.bf16.msra.mxu0 0
    %273 = vmatprep.subr.bf16.mxu0 0
    %274 = vmatpush2.bf16.msra.mxu0 0
    %275 = vmatprep.subr.bf16.mxu0 0
    %276 = vmatpush2.bf16.msra.mxu0 0
    %277 = vmatprep.mubr.bf16.mxu0 0
    %278 = vmatmul.mubr.bf16.gmra.mxu0 %v150
    %v279 = vpop.f32.mrf.mxu0
    %v280 = vadd.f32 %v134, %v279
    %v281 = vpop.f32.mrf.mxu0
    %v282 = vpop.f32.mrf.mxu0
    %v283 = vadd.f32 %v134, %v282
    %v284 = vpop.f32.mrf.mxu0
    %285 = vmatprep.mubr.bf16.mxu0 0
    %286 = vmatmul.mubr.bf16.gmra.mxu0 %v153
    %v287 = vpop.f32.mrf.mxu0
    %v288 = vadd.f32 %v134, %v287
    %v289 = vpop.f32.mrf.mxu0
    %v290 = vpop.f32.mrf.mxu0
    %v291 = vadd.f32 %v134, %v290
    %v292 = vpop.f32.mrf.mxu0
    %293 = vmatprep.mubr.bf16.mxu0 0
    %294 = vmatmul.mubr.bf16.gmra.mxu0 %v156
    %v295 = vpop.f32.mrf.mxu0
    %v296 = vadd.f32 %v134, %v295
    %v297 = vpop.f32.mrf.mxu0
    %v298 = vpop.f32.mrf.mxu0
    %v299 = vadd.f32 %v134, %v298
    %v300 = vpop.f32.mrf.mxu0
    %301 = vmatprep.mubr.bf16.mxu0 0
    %302 = vmatmul.mubr.bf16.gmra.mxu0 %v159
    %v303 = vpop.f32.mrf.mxu0
    %v304 = vadd.f32 %v134, %v303
    %v305 = vpop.f32.mrf.mxu0
    %v306 = vpop.f32.mrf.mxu0
    %v307 = vadd.f32 %v134, %v306
    %v308 = vpop.f32.mrf.mxu0
    %309 = vmatprep.mubr.bf16.mxu0 0
    %310 = vmatmul.mubr.bf16.gmra.mxu0 %v162
    %v311 = vpop.f32.mrf.mxu0
    %v312 = vadd.f32 %v134, %v311
    %v313 = vpop.f32.mrf.mxu0
    %v314 = vpop.f32.mrf.mxu0
    %v315 = vadd.f32 %v134, %v314
    %v316 = vpop.f32.mrf.mxu0
    %317 = vmatprep.mubr.bf16.mxu0 0
    %318 = vmatmul.mubr.bf16.gmra.mxu0 %v165
    %v319 = vpop.f32.mrf.mxu0
    %v320 = vadd.f32 %v134, %v319
    %v321 = vpop.f32.mrf.mxu0
    %v322 = vpop.f32.mrf.mxu0
    %v323 = vadd.f32 %v134, %v322
    %v324 = vpop.f32.mrf.mxu0
    %325 = vmatprep.mubr.bf16.mxu0 0
    %326 = vmatmul.mubr.bf16.gmra.mxu0 %v168
    %v327 = vpop.f32.mrf.mxu0
    %v328 = vadd.f32 %v134, %v327
    %v329 = vpop.f32.mrf.mxu0
    %v330 = vpop.f32.mrf.mxu0
    %v331 = vadd.f32 %v134, %v330
    %v332 = vpop.f32.mrf.mxu0
    %333 = vmatprep.mubr.bf16.mxu0 0
    %334 = vmatmul.mubr.bf16.gmra.mxu0 %v171
    %v335 = vpop.f32.mrf.mxu0
    %v336 = vadd.f32 %v134, %v335
    %v337 = vpop.f32.mrf.mxu0
    %v338 = vpop.f32.mrf.mxu0
    %v339 = vadd.f32 %v134, %v338
    %v340 = vpop.f32.mrf.mxu0
    %341 = vmatprep.mubr.bf16.mxu0 0
    %342 = vmatmul.mubr.bf16.gmra.mxu0 %v174
    %v343 = vpop.f32.mrf.mxu0
    %v344 = vadd.f32 %v134, %v343
    %v345 = vpop.f32.mrf.mxu0
    %v346 = vpop.f32.mrf.mxu0
    %v347 = vadd.f32 %v134, %v346
    %v348 = vpop.f32.mrf.mxu0
    %349 = vmatprep.mubr.bf16.mxu0 0
    %350 = vmatmul.mubr.bf16.gmra.mxu0 %v177
    %v351 = vpop.f32.mrf.mxu0
    %v352 = vadd.f32 %v134, %v351
    %v353 = vpop.f32.mrf.mxu0
    %v354 = vpop.f32.mrf.mxu0
    %v355 = vadd.f32 %v134, %v354
    %v356 = vpop.f32.mrf.mxu0
    %357 = vmatprep.mubr.bf16.mxu0 0
    %358 = vmatmul.mubr.bf16.gmra.mxu0 %v180
    %v359 = vpop.f32.mrf.mxu0
    %v360 = vadd.f32 %v134, %v359
    %v361 = vpop.f32.mrf.mxu0
    %v362 = vpop.f32.mrf.mxu0
    %v363 = vadd.f32 %v134, %v362
    %v364 = vpop.f32.mrf.mxu0
    %365 = vmatprep.mubr.bf16.mxu0 0
    %366 = vmatmul.mubr.bf16.gmra.mxu0 %v183
    %v367 = vpop.f32.mrf.mxu0
    %v368 = vadd.f32 %v134, %v367
    %v369 = vpop.f32.mrf.mxu0
    %v370 = vpop.f32.mrf.mxu0
    %v371 = vadd.f32 %v134, %v370
    %v372 = vpop.f32.mrf.mxu0
    %373 = vmatprep.mubr.bf16.mxu0 0
    %374 = vmatmul.mubr.bf16.gmra.mxu0 %v186
    %v375 = vpop.f32.mrf.mxu0
    %v376 = vadd.f32 %v134, %v375
    %v377 = vpop.f32.mrf.mxu0
    %v378 = vpop.f32.mrf.mxu0
    %v379 = vadd.f32 %v134, %v378
    %v380 = vpop.f32.mrf.mxu0
    %381 = vmatprep.mubr.bf16.mxu0 0
    %382 = vmatmul.mubr.bf16.gmra.mxu0 %v189
    %v383 = vpop.f32.mrf.mxu0
    %v384 = vadd.f32 %v134, %v383
    %v385 = vpop.f32.mrf.mxu0
    %v386 = vpop.f32.mrf.mxu0
    %v387 = vadd.f32 %v134, %v386
    %v388 = vpop.f32.mrf.mxu0
    %389 = vmatprep.mubr.bf16.mxu0 0
    %390 = vmatmul.mubr.bf16.gmra.mxu0 %v192
    %v391 = vpop.f32.mrf.mxu0
    %v392 = vadd.f32 %v134, %v391
    %v393 = vpop.f32.mrf.mxu0
    %v394 = vpop.f32.mrf.mxu0
    %v395 = vadd.f32 %v134, %v394
    %v396 = vpop.f32.mrf.mxu0
    %397 = vmatprep.mubr.bf16.mxu0 0
    %398 = vmatmul.mubr.bf16.gmra.mxu0 %v195
    %v399 = vpop.f32.mrf.mxu0
    %v400 = vadd.f32 %v134, %v399
    %v401 = vpop.f32.mrf.mxu0
    %v402 = vpop.f32.mrf.mxu0
    %v403 = vadd.f32 %v134, %v402
    %v404 = vpop.f32.mrf.mxu0
    %405 = vmatprep.mubr.bf16.mxu0 0
    %406 = vmatmul.mubr.bf16.gmra.mxu0 %v198
    %v407 = vpop.f32.mrf.mxu0
    %v408 = vadd.f32 %v134, %v407
    %v409 = vpop.f32.mrf.mxu0
    %v410 = vpop.f32.mrf.mxu0
    %v411 = vadd.f32 %v134, %v410
    %v412 = vpop.f32.mrf.mxu0
    %413 = vmatprep.mubr.bf16.mxu0 0
    %414 = vmatmul.mubr.bf16.gmra.mxu0 %v201
    %v415 = vpop.f32.mrf.mxu0
    %v416 = vadd.f32 %v134, %v415
    %v417 = vpop.f32.mrf.mxu0
    %v418 = vpop.f32.mrf.mxu0
    %v419 = vadd.f32 %v134, %v418
    %v420 = vpop.f32.mrf.mxu0
    %421 = vmatprep.mubr.bf16.mxu0 0
    %422 = vmatmul.mubr.bf16.gmra.mxu0 %v204
    %v423 = vpop.f32.mrf.mxu0
    %v424 = vadd.f32 %v134, %v423
    %v425 = vpop.f32.mrf.mxu0
    %v426 = vpop.f32.mrf.mxu0
    %v427 = vadd.f32 %v134, %v426
    %v428 = vpop.f32.mrf.mxu0
    %429 = vmatprep.mubr.bf16.mxu0 0
    %430 = vmatmul.mubr.bf16.gmra.mxu0 %v207
    %v431 = vpop.f32.mrf.mxu0
    %v432 = vadd.f32 %v134, %v431
    %v433 = vpop.f32.mrf.mxu0
    %v434 = vpop.f32.mrf.mxu0
    %v435 = vadd.f32 %v134, %v434
    %v436 = vpop.f32.mrf.mxu0
    %437 = vmatprep.mubr.bf16.mxu0 0
    %438 = vmatmul.mubr.bf16.gmra.mxu0 %v210
    %v439 = vpop.f32.mrf.mxu0
    %v440 = vadd.f32 %v134, %v439
    %v441 = vpop.f32.mrf.mxu0
    %v442 = vpop.f32.mrf.mxu0
    %v443 = vadd.f32 %v134, %v442
    %v444 = vpop.f32.mrf.mxu0
    %445 = vmatprep.mubr.bf16.mxu0 0
    %446 = vmatmul.mubr.bf16.gmra.mxu0 %v213
    %v447 = vpop.f32.mrf.mxu0
    %v448 = vadd.f32 %v134, %v447
    %v449 = vpop.f32.mrf.mxu0
    %v450 = vpop.f32.mrf.mxu0
    %v451 = vadd.f32 %v134, %v450
    %v452 = vpop.f32.mrf.mxu0
    %453 = vmatprep.mubr.bf16.mxu0 0
    %454 = vmatmul.mubr.bf16.gmra.mxu0 %v216
    %v455 = vpop.f32.mrf.mxu0
    %v456 = vadd.f32 %v134, %v455
    %v457 = vpop.f32.mrf.mxu0
    %v458 = vpop.f32.mrf.mxu0
    %v459 = vadd.f32 %v134, %v458
    %v460 = vpop.f32.mrf.mxu0
    %461 = vmatprep.mubr.bf16.mxu0 0
    %462 = vmatmul.mubr.bf16.gmra.mxu0 %v219
    %v463 = vpop.f32.mrf.mxu0
    %v464 = vadd.f32 %v134, %v463
    %v465 = vpop.f32.mrf.mxu0
    %v466 = vpop.f32.mrf.mxu0
    %v467 = vadd.f32 %v134, %v466
    %v468 = vpop.f32.mrf.mxu0
    %469 = vmatprep.mubr.bf16.mxu0 0
    %470 = vmatmul.mubr.bf16.gmra.mxu0 %v222
    %v471 = vpop.f32.mrf.mxu0
    %v472 = vadd.f32 %v134, %v471
    %v473 = vpop.f32.mrf.mxu0
    %v474 = vpop.f32.mrf.mxu0
    %v475 = vadd.f32 %v134, %v474
    %v476 = vpop.f32.mrf.mxu0
    %477 = vmatprep.mubr.bf16.mxu0 0
    %478 = vmatmul.mubr.bf16.gmra.mxu0 %v225
    %v479 = vpop.f32.mrf.mxu0
    %v480 = vadd.f32 %v134, %v479
    %v481 = vpop.f32.mrf.mxu0
    %v482 = vpop.f32.mrf.mxu0
    %v483 = vadd.f32 %v134, %v482
    %v484 = vpop.f32.mrf.mxu0
    %485 = vmatprep.mubr.bf16.mxu0 0
    %486 = vmatmul.mubr.bf16.gmra.mxu0 %v228
    %v487 = vpop.f32.mrf.mxu0
    %v488 = vadd.f32 %v134, %v487
    %v489 = vpop.f32.mrf.mxu0
    %v490 = vpop.f32.mrf.mxu0
    %v491 = vadd.f32 %v134, %v490
    %v492 = vpop.f32.mrf.mxu0
    %493 = vmatprep.mubr.bf16.mxu0 0
    %494 = vmatmul.mubr.bf16.gmra.mxu0 %v231
    %v495 = vpop.f32.mrf.mxu0
    %v496 = vadd.f32 %v134, %v495
    %v497 = vpop.f32.mrf.mxu0
    %v498 = vpop.f32.mrf.mxu0
    %v499 = vadd.f32 %v134, %v498
    %v500 = vpop.f32.mrf.mxu0
    %501 = vmatprep.mubr.bf16.mxu0 0
    %502 = vmatmul.mubr.bf16.gmra.mxu0 %v234
    %v503 = vpop.f32.mrf.mxu0
    %v504 = vadd.f32 %v134, %v503
    %v505 = vpop.f32.mrf.mxu0
    %v506 = vpop.f32.mrf.mxu0
    %v507 = vadd.f32 %v134, %v506
    %v508 = vpop.f32.mrf.mxu0
    %509 = vmatprep.mubr.bf16.mxu0 0
    %510 = vmatmul.mubr.bf16.gmra.mxu0 %v237
    %v511 = vpop.f32.mrf.mxu0
    %v512 = vadd.f32 %v134, %v511
    %v513 = vpop.f32.mrf.mxu0
    %v514 = vpop.f32.mrf.mxu0
    %v515 = vadd.f32 %v134, %v514
    %v516 = vpop.f32.mrf.mxu0
    %517 = vmatprep.mubr.bf16.mxu0 0
    %518 = vmatmul.mubr.bf16.gmra.mxu0 %v240
    %v519 = vpop.f32.mrf.mxu0
    %v520 = vadd.f32 %v134, %v519
    %v521 = vpop.f32.mrf.mxu0
    %v522 = vpop.f32.mrf.mxu0
    %v523 = vadd.f32 %v134, %v522
    %v524 = vpop.f32.mrf.mxu0
    %525 = vmatprep.mubr.bf16.mxu0 0
    %526 = vmatmul.mubr.bf16.gmra.mxu0 %v243
    %v527 = vpop.f32.mrf.mxu0
    %v528 = vadd.f32 %v134, %v527
    %v529 = vpop.f32.mrf.mxu0
    %v530 = vpop.f32.mrf.mxu0
    %v531 = vadd.f32 %v134, %v530
    %v532 = vpop.f32.mrf.mxu0
    %533 = vdwg.mxu0
    %v534 = vtanh.pop %v280
    %v535 = vtanh.pop %v283
    %v536 = vtanh.pop %v288
    %v537 = vtanh.pop %v291
    %v538 = vtanh.pop %v296
    %v539 = vtanh.pop %v299
    %v540 = vtanh.pop %v304
    %v541 = vtanh.pop %v307
    %v542 = vtanh.pop %v312
    %v543 = vtanh.pop %v315
    %v544 = vtanh.pop %v320
    %v545 = vtanh.pop %v323
    %v546 = vtanh.pop %v328
    %v547 = vtanh.pop %v331
    %v548 = vtanh.pop %v336
    %v549 = vtanh.pop %v339
    %v550 = vtanh.pop %v344
    %v551 = vtanh.pop %v347
    %v552 = vtanh.pop %v352
    %v553 = vtanh.pop %v355
    %v554 = vtanh.pop %v360
    %v555 = vtanh.pop %v363
    %v556 = vtanh.pop %v368
    %v557 = vtanh.pop %v371
    %v558 = vtanh.pop %v376
    %v559 = vtanh.pop %v379
    %v560 = vtanh.pop %v384
    %v561 = vtanh.pop %v387
    %v562 = vtanh.pop %v392
    %v563 = vtanh.pop %v395
    %v564 = vtanh.pop %v400
    %v565 = vtanh.pop %v403
    %v566 = vtanh.pop %v408
    %v567 = vtanh.pop %v411
    %v568 = vtanh.pop %v416
    %v569 = vtanh.pop %v419
    %v570 = vtanh.pop %v424
    %v571 = vtanh.pop %v427
    %v572 = vtanh.pop %v432
    %v573 = vtanh.pop %v435
    %v574 = vtanh.pop %v440
    %v575 = vtanh.pop %v443
    %v576 = vtanh.pop %v448
    %v577 = vtanh.pop %v451
    %v578 = vtanh.pop %v456
    %v579 = vtanh.pop %v459
    %v580 = vtanh.pop %v464
    %v581 = vtanh.pop %v467
    %v582 = vtanh.pop %v472
    %v583 = vtanh.pop %v475
    %v584 = vtanh.pop %v480
    %v585 = vtanh.pop %v483
    %v586 = vtanh.pop %v488
    %v587 = vtanh.pop %v491
    %v588 = vtanh.pop %v496
    %v589 = vtanh.pop %v499
    %v590 = vtanh.pop %v504
    %v591 = vtanh.pop %v507
    %v592 = vtanh.pop %v512
    %v593 = vtanh.pop %v515
    %v594 = vtanh.pop %v520
    %v595 = vtanh.pop %v523
    %v596 = vtanh.pop %v528
    %v597 = vtanh.pop %v531
    %v598 = vpack.c.bf16 %v535, %v534
    %v599 = vpack.c.bf16 %v537, %v536
    %v600 = vpack.c.bf16 %v539, %v538
    %v601 = vpack.c.bf16 %v541, %v540
    %v602 = vpack.c.bf16 %v543, %v542
    %v603 = vpack.c.bf16 %v545, %v544
    %v604 = vpack.c.bf16 %v547, %v546
    %v605 = vpack.c.bf16 %v549, %v548
    %v606 = vpack.c.bf16 %v551, %v550
    %v607 = vpack.c.bf16 %v553, %v552
    %v608 = vpack.c.bf16 %v555, %v554
    %v609 = vpack.c.bf16 %v557, %v556
    %v610 = vpack.c.bf16 %v559, %v558
    %v611 = vpack.c.bf16 %v561, %v560
    %v612 = vpack.c.bf16 %v563, %v562
    %v613 = vpack.c.bf16 %v565, %v564
    %v614 = vpack.c.bf16 %v567, %v566
    %v615 = vpack.c.bf16 %v569, %v568
    %v616 = vpack.c.bf16 %v571, %v570
    %v617 = vpack.c.bf16 %v573, %v572
    %v618 = vpack.c.bf16 %v575, %v574
    %v619 = vpack.c.bf16 %v577, %v576
    %v620 = vpack.c.bf16 %v579, %v578
    %v621 = vpack.c.bf16 %v581, %v580
    %v622 = vpack.c.bf16 %v583, %v582
    %v623 = vpack.c.bf16 %v585, %v584
    %v624 = vpack.c.bf16 %v587, %v586
    %v625 = vpack.c.bf16 %v589, %v588
    %v626 = vpack.c.bf16 %v591, %v590
    %v627 = vpack.c.bf16 %v593, %v592
    %v628 = vpack.c.bf16 %v595, %v594
    %v629 = vpack.c.bf16 %v597, %v596
    %v630 = vld [vmem:[%s3] sm:$0xf]
    %v631 = vld [vmem:[%s3 + $0x4] sm:$0xf]
    %v632 = vld [vmem:[%s3 + $0x8] sm:$0xf]
    %v633 = vld [vmem:[%s3 + $0xc] sm:$0xf]
    %v634 = vld [vmem:[%s3 + $0x10] sm:$0xf]
    %v635 = vld [vmem:[%s3 + $0x14] sm:$0xf]
    %v636 = vld [vmem:[%s3 + $0x18] sm:$0xf]
    %v637 = vld [vmem:[%s3 + $0x1c] sm:$0xf]
    %v638 = vld [vmem:[%s4] sm:$0x1]
    %v640 = vlaneseq
    %v641 = vshrl.u32 %v640, 7
    %v642 = vsub.s32 0, %v641
    %v643 = vrot.slane %v638, %v642
    %v653 = vunpack.c.l.b16 %v630
    %v654 = vunpack.c.l.b16 %v631
    %v655 = vunpack.c.l.b16 %v632
    %v656 = vunpack.c.l.b16 %v633
    %v657 = vunpack.c.l.b16 %v634
    %v658 = vunpack.c.l.b16 %v635
    %v659 = vunpack.c.l.b16 %v636
    %v660 = vunpack.c.l.b16 %v637
    %v661 = vpack.c.b16 %v654, %v653
    %v662 = vpack.c.b16 %v656, %v655
    %v663 = vpack.c.b16 %v658, %v657
    %v664 = vpack.c.b16 %v660, %v659
    %vm669 = vcmask 523264
    %v671 = vsel %vm669, %v598, 0
    %v674 = vsel %vm669, %v599, 0
    %v677 = vsel %vm669, %v600, 0
    %v680 = vsel %vm669, %v601, 0
    %v683 = vsel %vm669, %v602, 0
    %v686 = vsel %vm669, %v603, 0
    %v689 = vsel %vm669, %v604, 0
    %v692 = vsel %vm669, %v605, 0
    %v695 = vsel %vm669, %v606, 0
    %v698 = vsel %vm669, %v607, 0
    %v701 = vsel %vm669, %v608, 0
    %v704 = vsel %vm669, %v609, 0
    %v707 = vsel %vm669, %v610, 0
    %v710 = vsel %vm669, %v611, 0
    %v713 = vsel %vm669, %v612, 0
    %v716 = vsel %vm669, %v613, 0
    %v719 = vsel %vm669, %v614, 0
    %v722 = vsel %vm669, %v615, 0
    %v725 = vsel %vm669, %v616, 0
    %v728 = vsel %vm669, %v617, 0
    %v731 = vsel %vm669, %v618, 0
    %v734 = vsel %vm669, %v619, 0
    %v737 = vsel %vm669, %v620, 0
    %v740 = vsel %vm669, %v621, 0
    %v743 = vsel %vm669, %v622, 0
    %v746 = vsel %vm669, %v623, 0
    %v749 = vsel %vm669, %v624, 0
    %v752 = vsel %vm669, %v625, 0
    %v755 = vsel %vm669, %v626, 0
    %v758 = vsel %vm669, %v627, 0
    %v761 = vsel %vm669, %v628, 0
    %v764 = vsel %vm669, %v629, 0
    %766 = vmatprep.subr.bf16.mxu0 0
    %767 = vmatpush1.bf16.msra.mxu0 0
    %768 = vmatprep.subr.bf16.mxu0 0
    %769 = vmatpush1.bf16.msra.mxu0 0
    %770 = vmatprep.subr.bf16.mxu0 0
    %771 = vmatpush1.bf16.msra.mxu0 0
    %772 = vmatprep.subr.bf16.mxu0 0
    %773 = vmatpush1.bf16.msra.mxu0 0
    %774 = vmatprep.subr.bf16.mxu0 0
    %775 = vmatpush1.bf16.msra.mxu0 %v664
    %776 = vmatprep.subr.bf16.mxu0 0
    %777 = vmatpush1.bf16.msra.mxu0 %v663
    %778 = vmatprep.subr.bf16.mxu0 0
    %779 = vmatpush1.bf16.msra.mxu0 %v662
    %780 = vmatprep.subr.bf16.mxu0 0
    %781 = vmatpush1.bf16.msra.mxu0 %v661
    %782 = vmatprep.subr.bf16.mxu0 0
    %783 = vmatpush2.bf16.msra.mxu0 0
    %784 = vmatprep.subr.bf16.mxu0 0
    %785 = vmatpush2.bf16.msra.mxu0 0
    %786 = vmatprep.subr.bf16.mxu0 0
    %787 = vmatpush2.bf16.msra.mxu0 0
    %788 = vmatprep.subr.bf16.mxu0 0
    %789 = vmatpush2.bf16.msra.mxu0 0
    %790 = vmatprep.subr.bf16.mxu0 0
    %791 = vmatpush2.bf16.msra.mxu0 0
    %792 = vmatprep.subr.bf16.mxu0 0
    %793 = vmatpush2.bf16.msra.mxu0 0
    %794 = vmatprep.subr.bf16.mxu0 0
    %795 = vmatpush2.bf16.msra.mxu0 0
    %796 = vmatprep.subr.bf16.mxu0 0
    %797 = vmatpush2.bf16.msra.mxu0 0
    %798 = vmatprep.mubr.bf16.mxu0 0
    %799 = vmatmul.mubr.bf16.gmra.mxu0 %v671
    %v800 = vpop.f32.mrf.mxu0
    %v801 = vadd.f32 %v643, %v800
    %v802 = vpop.f32.mrf.mxu0
    %v803 = vpop.f32.mrf.mxu0
    %v804 = vadd.f32 %v643, %v803
    %v805 = vpop.f32.mrf.mxu0
    %806 = vmatprep.mubr.bf16.mxu0 0
    %807 = vmatmul.mubr.bf16.gmra.mxu0 %v674
    %v808 = vpop.f32.mrf.mxu0
    %v809 = vadd.f32 %v643, %v808
    %v810 = vpop.f32.mrf.mxu0
    %v811 = vpop.f32.mrf.mxu0
    %v812 = vadd.f32 %v643, %v811
    %v813 = vpop.f32.mrf.mxu0
    %814 = vmatprep.mubr.bf16.mxu0 0
    %815 = vmatmul.mubr.bf16.gmra.mxu0 %v677
    %v816 = vpop.f32.mrf.mxu0
    %v817 = vadd.f32 %v643, %v816
    %v818 = vpop.f32.mrf.mxu0
    %v819 = vpop.f32.mrf.mxu0
    %v820 = vadd.f32 %v643, %v819
    %v821 = vpop.f32.mrf.mxu0
    %822 = vmatprep.mubr.bf16.mxu0 0
    %823 = vmatmul.mubr.bf16.gmra.mxu0 %v680
    %v824 = vpop.f32.mrf.mxu0
    %v825 = vadd.f32 %v643, %v824
    %v826 = vpop.f32.mrf.mxu0
    %v827 = vpop.f32.mrf.mxu0
    %v828 = vadd.f32 %v643, %v827
    %v829 = vpop.f32.mrf.mxu0
    %830 = vmatprep.mubr.bf16.mxu0 0
    %831 = vmatmul.mubr.bf16.gmra.mxu0 %v683
    %v832 = vpop.f32.mrf.mxu0
    %v833 = vadd.f32 %v643, %v832
    %v834 = vpop.f32.mrf.mxu0
    %v835 = vpop.f32.mrf.mxu0
    %v836 = vadd.f32 %v643, %v835
    %v837 = vpop.f32.mrf.mxu0
    %838 = vmatprep.mubr.bf16.mxu0 0
    %839 = vmatmul.mubr.bf16.gmra.mxu0 %v686
    %v840 = vpop.f32.mrf.mxu0
    %v841 = vadd.f32 %v643, %v840
    %v842 = vpop.f32.mrf.mxu0
    %v843 = vpop.f32.mrf.mxu0
    %v844 = vadd.f32 %v643, %v843
    %v845 = vpop.f32.mrf.mxu0
    %846 = vmatprep.mubr.bf16.mxu0 0
    %847 = vmatmul.mubr.bf16.gmra.mxu0 %v689
    %v848 = vpop.f32.mrf.mxu0
    %v849 = vadd.f32 %v643, %v848
    %v850 = vpop.f32.mrf.mxu0
    %v851 = vpop.f32.mrf.mxu0
    %v852 = vadd.f32 %v643, %v851
    %v853 = vpop.f32.mrf.mxu0
    %854 = vmatprep.mubr.bf16.mxu0 0
    %855 = vmatmul.mubr.bf16.gmra.mxu0 %v692
    %v856 = vpop.f32.mrf.mxu0
    %v857 = vadd.f32 %v643, %v856
    %v858 = vpop.f32.mrf.mxu0
    %v859 = vpop.f32.mrf.mxu0
    %v860 = vadd.f32 %v643, %v859
    %v861 = vpop.f32.mrf.mxu0
    %862 = vmatprep.mubr.bf16.mxu0 0
    %863 = vmatmul.mubr.bf16.gmra.mxu0 %v695
    %v864 = vpop.f32.mrf.mxu0
    %v865 = vadd.f32 %v643, %v864
    %v866 = vpop.f32.mrf.mxu0
    %v867 = vpop.f32.mrf.mxu0
    %v868 = vadd.f32 %v643, %v867
    %v869 = vpop.f32.mrf.mxu0
    %870 = vmatprep.mubr.bf16.mxu0 0
    %871 = vmatmul.mubr.bf16.gmra.mxu0 %v698
    %v872 = vpop.f32.mrf.mxu0
    %v873 = vadd.f32 %v643, %v872
    %v874 = vpop.f32.mrf.mxu0
    %v875 = vpop.f32.mrf.mxu0
    %v876 = vadd.f32 %v643, %v875
    %v877 = vpop.f32.mrf.mxu0
    %878 = vmatprep.mubr.bf16.mxu0 0
    %879 = vmatmul.mubr.bf16.gmra.mxu0 %v701
    %v880 = vpop.f32.mrf.mxu0
    %v881 = vadd.f32 %v643, %v880
    %v882 = vpop.f32.mrf.mxu0
    %v883 = vpop.f32.mrf.mxu0
    %v884 = vadd.f32 %v643, %v883
    %v885 = vpop.f32.mrf.mxu0
    %886 = vmatprep.mubr.bf16.mxu0 0
    %887 = vmatmul.mubr.bf16.gmra.mxu0 %v704
    %v888 = vpop.f32.mrf.mxu0
    %v889 = vadd.f32 %v643, %v888
    %v890 = vpop.f32.mrf.mxu0
    %v891 = vpop.f32.mrf.mxu0
    %v892 = vadd.f32 %v643, %v891
    %v893 = vpop.f32.mrf.mxu0
    %894 = vmatprep.mubr.bf16.mxu0 0
    %895 = vmatmul.mubr.bf16.gmra.mxu0 %v707
    %v896 = vpop.f32.mrf.mxu0
    %v897 = vadd.f32 %v643, %v896
    %v898 = vpop.f32.mrf.mxu0
    %v899 = vpop.f32.mrf.mxu0
    %v900 = vadd.f32 %v643, %v899
    %v901 = vpop.f32.mrf.mxu0
    %902 = vmatprep.mubr.bf16.mxu0 0
    %903 = vmatmul.mubr.bf16.gmra.mxu0 %v710
    %v904 = vpop.f32.mrf.mxu0
    %v905 = vadd.f32 %v643, %v904
    %v906 = vpop.f32.mrf.mxu0
    %v907 = vpop.f32.mrf.mxu0
    %v908 = vadd.f32 %v643, %v907
    %v909 = vpop.f32.mrf.mxu0
    %910 = vmatprep.mubr.bf16.mxu0 0
    %911 = vmatmul.mubr.bf16.gmra.mxu0 %v713
    %v912 = vpop.f32.mrf.mxu0
    %v913 = vadd.f32 %v643, %v912
    %v914 = vpop.f32.mrf.mxu0
    %v915 = vpop.f32.mrf.mxu0
    %v916 = vadd.f32 %v643, %v915
    %v917 = vpop.f32.mrf.mxu0
    %918 = vmatprep.mubr.bf16.mxu0 0
    %919 = vmatmul.mubr.bf16.gmra.mxu0 %v716
    %v920 = vpop.f32.mrf.mxu0
    %v921 = vadd.f32 %v643, %v920
    %v922 = vpop.f32.mrf.mxu0
    %v923 = vpop.f32.mrf.mxu0
    %v924 = vadd.f32 %v643, %v923
    %v925 = vpop.f32.mrf.mxu0
    %926 = vmatprep.mubr.bf16.mxu0 0
    %927 = vmatmul.mubr.bf16.gmra.mxu0 %v719
    %v928 = vpop.f32.mrf.mxu0
    %v929 = vadd.f32 %v643, %v928
    %v930 = vpop.f32.mrf.mxu0
    %v931 = vpop.f32.mrf.mxu0
    %v932 = vadd.f32 %v643, %v931
    %v933 = vpop.f32.mrf.mxu0
    %934 = vmatprep.mubr.bf16.mxu0 0
    %935 = vmatmul.mubr.bf16.gmra.mxu0 %v722
    %v936 = vpop.f32.mrf.mxu0
    %v937 = vadd.f32 %v643, %v936
    %v938 = vpop.f32.mrf.mxu0
    %v939 = vpop.f32.mrf.mxu0
    %v940 = vadd.f32 %v643, %v939
    %v941 = vpop.f32.mrf.mxu0
    %942 = vmatprep.mubr.bf16.mxu0 0
    %943 = vmatmul.mubr.bf16.gmra.mxu0 %v725
    %v944 = vpop.f32.mrf.mxu0
    %v945 = vadd.f32 %v643, %v944
    %v946 = vpop.f32.mrf.mxu0
    %v947 = vpop.f32.mrf.mxu0
    %v948 = vadd.f32 %v643, %v947
    %v949 = vpop.f32.mrf.mxu0
    %950 = vmatprep.mubr.bf16.mxu0 0
    %951 = vmatmul.mubr.bf16.gmra.mxu0 %v728
    %v952 = vpop.f32.mrf.mxu0
    %v953 = vadd.f32 %v643, %v952
    %v954 = vpop.f32.mrf.mxu0
    %v955 = vpop.f32.mrf.mxu0
    %v956 = vadd.f32 %v643, %v955
    %v957 = vpop.f32.mrf.mxu0
    %958 = vmatprep.mubr.bf16.mxu0 0
    %959 = vmatmul.mubr.bf16.gmra.mxu0 %v731
    %v960 = vpop.f32.mrf.mxu0
    %v961 = vadd.f32 %v643, %v960
    %v962 = vpop.f32.mrf.mxu0
    %v963 = vpop.f32.mrf.mxu0
    %v964 = vadd.f32 %v643, %v963
    %v965 = vpop.f32.mrf.mxu0
    %966 = vmatprep.mubr.bf16.mxu0 0
    %967 = vmatmul.mubr.bf16.gmra.mxu0 %v734
    %v968 = vpop.f32.mrf.mxu0
    %v969 = vadd.f32 %v643, %v968
    %v970 = vpop.f32.mrf.mxu0
    %v971 = vpop.f32.mrf.mxu0
    %v972 = vadd.f32 %v643, %v971
    %v973 = vpop.f32.mrf.mxu0
    %974 = vmatprep.mubr.bf16.mxu0 0
    %975 = vmatmul.mubr.bf16.gmra.mxu0 %v737
    %v976 = vpop.f32.mrf.mxu0
    %v977 = vadd.f32 %v643, %v976
    %v978 = vpop.f32.mrf.mxu0
    %v979 = vpop.f32.mrf.mxu0
    %v980 = vadd.f32 %v643, %v979
    %v981 = vpop.f32.mrf.mxu0
    %982 = vmatprep.mubr.bf16.mxu0 0
    %983 = vmatmul.mubr.bf16.gmra.mxu0 %v740
    %v984 = vpop.f32.mrf.mxu0
    %v985 = vadd.f32 %v643, %v984
    %v986 = vpop.f32.mrf.mxu0
    %v987 = vpop.f32.mrf.mxu0
    %v988 = vadd.f32 %v643, %v987
    %v989 = vpop.f32.mrf.mxu0
    %990 = vmatprep.mubr.bf16.mxu0 0
    %991 = vmatmul.mubr.bf16.gmra.mxu0 %v743
    %v992 = vpop.f32.mrf.mxu0
    %v993 = vadd.f32 %v643, %v992
    %v994 = vpop.f32.mrf.mxu0
    %v995 = vpop.f32.mrf.mxu0
    %v996 = vadd.f32 %v643, %v995
    %v997 = vpop.f32.mrf.mxu0
    %998 = vmatprep.mubr.bf16.mxu0 0
    %999 = vmatmul.mubr.bf16.gmra.mxu0 %v746
    %v1000 = vpop.f32.mrf.mxu0
    %v1001 = vadd.f32 %v643, %v1000
    %v1002 = vpop.f32.mrf.mxu0
    %v1003 = vpop.f32.mrf.mxu0
    %v1004 = vadd.f32 %v643, %v1003
    %v1005 = vpop.f32.mrf.mxu0
    %1006 = vmatprep.mubr.bf16.mxu0 0
    %1007 = vmatmul.mubr.bf16.gmra.mxu0 %v749
    %v1008 = vpop.f32.mrf.mxu0
    %v1009 = vadd.f32 %v643, %v1008
    %v1010 = vpop.f32.mrf.mxu0
    %v1011 = vpop.f32.mrf.mxu0
    %v1012 = vadd.f32 %v643, %v1011
    %v1013 = vpop.f32.mrf.mxu0
    %1014 = vmatprep.mubr.bf16.mxu0 0
    %1015 = vmatmul.mubr.bf16.gmra.mxu0 %v752
    %v1016 = vpop.f32.mrf.mxu0
    %v1017 = vadd.f32 %v643, %v1016
    %v1018 = vpop.f32.mrf.mxu0
    %v1019 = vpop.f32.mrf.mxu0
    %v1020 = vadd.f32 %v643, %v1019
    %v1021 = vpop.f32.mrf.mxu0
    %1022 = vmatprep.mubr.bf16.mxu0 0
    %1023 = vmatmul.mubr.bf16.gmra.mxu0 %v755
    %v1024 = vpop.f32.mrf.mxu0
    %v1025 = vadd.f32 %v643, %v1024
    %v1026 = vpop.f32.mrf.mxu0
    %v1027 = vpop.f32.mrf.mxu0
    %v1028 = vadd.f32 %v643, %v1027
    %v1029 = vpop.f32.mrf.mxu0
    %1030 = vmatprep.mubr.bf16.mxu0 0
    %1031 = vmatmul.mubr.bf16.gmra.mxu0 %v758
    %v1032 = vpop.f32.mrf.mxu0
    %v1033 = vadd.f32 %v643, %v1032
    %v1034 = vpop.f32.mrf.mxu0
    %v1035 = vpop.f32.mrf.mxu0
    %v1036 = vadd.f32 %v643, %v1035
    %v1037 = vpop.f32.mrf.mxu0
    %1038 = vmatprep.mubr.bf16.mxu0 0
    %1039 = vmatmul.mubr.bf16.gmra.mxu0 %v761
    %v1040 = vpop.f32.mrf.mxu0
    %v1041 = vadd.f32 %v643, %v1040
    %v1042 = vpop.f32.mrf.mxu0
    %v1043 = vpop.f32.mrf.mxu0
    %v1044 = vadd.f32 %v643, %v1043
    %v1045 = vpop.f32.mrf.mxu0
    %1046 = vmatprep.mubr.bf16.mxu0 0
    %1047 = vmatmul.mubr.bf16.gmra.mxu0 %v764
    %v1048 = vpop.f32.mrf.mxu0
    %v1049 = vadd.f32 %v643, %v1048
    %v1050 = vpop.f32.mrf.mxu0
    %v1051 = vpop.f32.mrf.mxu0
    %v1052 = vadd.f32 %v643, %v1051
    %v1053 = vpop.f32.mrf.mxu0
    %1054 = vdwg.mxu0
    %v1055 = vtanh.pop %v801
    %v1056 = vtanh.pop %v804
    %v1057 = vtanh.pop %v809
    %v1058 = vtanh.pop %v812
    %v1059 = vtanh.pop %v817
    %v1060 = vtanh.pop %v820
    %v1061 = vtanh.pop %v825
    %v1062 = vtanh.pop %v828
    %v1063 = vtanh.pop %v833
    %v1064 = vtanh.pop %v836
    %v1065 = vtanh.pop %v841
    %v1066 = vtanh.pop %v844
    %v1067 = vtanh.pop %v849
    %v1068 = vtanh.pop %v852
    %v1069 = vtanh.pop %v857
    %v1070 = vtanh.pop %v860
    %v1071 = vtanh.pop %v865
    %v1072 = vtanh.pop %v868
    %v1073 = vtanh.pop %v873
    %v1074 = vtanh.pop %v876
    %v1075 = vtanh.pop %v881
    %v1076 = vtanh.pop %v884
    %v1077 = vtanh.pop %v889
    %v1078 = vtanh.pop %v892
    %v1079 = vtanh.pop %v897
    %v1080 = vtanh.pop %v900
    %v1081 = vtanh.pop %v905
    %v1082 = vtanh.pop %v908
    %v1083 = vtanh.pop %v913
    %v1084 = vtanh.pop %v916
    %v1085 = vtanh.pop %v921
    %v1086 = vtanh.pop %v924
    %v1087 = vtanh.pop %v929
    %v1088 = vtanh.pop %v932
    %v1089 = vtanh.pop %v937
    %v1090 = vtanh.pop %v940
    %v1091 = vtanh.pop %v945
    %v1092 = vtanh.pop %v948
    %v1093 = vtanh.pop %v953
    %v1094 = vtanh.pop %v956
    %v1095 = vtanh.pop %v961
    %v1096 = vtanh.pop %v964
    %v1097 = vtanh.pop %v969
    %v1098 = vtanh.pop %v972
    %v1099 = vtanh.pop %v977
    %v1100 = vtanh.pop %v980
    %v1101 = vtanh.pop %v985
    %v1102 = vtanh.pop %v988
    %v1103 = vtanh.pop %v993
    %v1104 = vtanh.pop %v996
    %v1105 = vtanh.pop %v1001
    %v1106 = vtanh.pop %v1004
    %v1107 = vtanh.pop %v1009
    %v1108 = vtanh.pop %v1012
    %v1109 = vtanh.pop %v1017
    %v1110 = vtanh.pop %v1020
    %v1111 = vtanh.pop %v1025
    %v1112 = vtanh.pop %v1028
    %v1113 = vtanh.pop %v1033
    %v1114 = vtanh.pop %v1036
    %v1115 = vtanh.pop %v1041
    %v1116 = vtanh.pop %v1044
    %v1117 = vtanh.pop %v1049
    %v1118 = vtanh.pop %v1052
    %v1119 = vpack.c.bf16 %v1056, %v1055
    %v1120 = vpack.c.bf16 %v1058, %v1057
    %v1121 = vpack.c.bf16 %v1060, %v1059
    %v1122 = vpack.c.bf16 %v1062, %v1061
    %v1123 = vpack.c.bf16 %v1064, %v1063
    %v1124 = vpack.c.bf16 %v1066, %v1065
    %v1125 = vpack.c.bf16 %v1068, %v1067
    %v1126 = vpack.c.bf16 %v1070, %v1069
    %v1127 = vpack.c.bf16 %v1072, %v1071
    %v1128 = vpack.c.bf16 %v1074, %v1073
    %v1129 = vpack.c.bf16 %v1076, %v1075
    %v1130 = vpack.c.bf16 %v1078, %v1077
    %v1131 = vpack.c.bf16 %v1080, %v1079
    %v1132 = vpack.c.bf16 %v1082, %v1081
    %v1133 = vpack.c.bf16 %v1084, %v1083
    %v1134 = vpack.c.bf16 %v1086, %v1085
    %v1135 = vpack.c.bf16 %v1088, %v1087
    %v1136 = vpack.c.bf16 %v1090, %v1089
    %v1137 = vpack.c.bf16 %v1092, %v1091
    %v1138 = vpack.c.bf16 %v1094, %v1093
    %v1139 = vpack.c.bf16 %v1096, %v1095
    %v1140 = vpack.c.bf16 %v1098, %v1097
    %v1141 = vpack.c.bf16 %v1100, %v1099
    %v1142 = vpack.c.bf16 %v1102, %v1101
    %v1143 = vpack.c.bf16 %v1104, %v1103
    %v1144 = vpack.c.bf16 %v1106, %v1105
    %v1145 = vpack.c.bf16 %v1108, %v1107
    %v1146 = vpack.c.bf16 %v1110, %v1109
    %v1147 = vpack.c.bf16 %v1112, %v1111
    %v1148 = vpack.c.bf16 %v1114, %v1113
    %v1149 = vpack.c.bf16 %v1116, %v1115
    %v1150 = vpack.c.bf16 %v1118, %v1117
    %v1151 = vld [vmem:[%s5] sm:$0x1]
    %s1152 = sld [smem:[#allocation2]]
    %v1153 = vstv %s1152
    %v1155 = vsel %vm669, %v1151, 0
    %v1158 = vsel %vm669, %v1119, 0
    %v1161 = vsel %vm669, %v1120, 0
    %v1164 = vsel %vm669, %v1121, 0
    %v1167 = vsel %vm669, %v1122, 0
    %v1170 = vsel %vm669, %v1123, 0
    %v1173 = vsel %vm669, %v1124, 0
    %v1176 = vsel %vm669, %v1125, 0
    %v1179 = vsel %vm669, %v1126, 0
    %v1182 = vsel %vm669, %v1127, 0
    %v1185 = vsel %vm669, %v1128, 0
    %v1188 = vsel %vm669, %v1129, 0
    %v1191 = vsel %vm669, %v1130, 0
    %v1194 = vsel %vm669, %v1131, 0
    %v1197 = vsel %vm669, %v1132, 0
    %v1200 = vsel %vm669, %v1133, 0
    %v1203 = vsel %vm669, %v1134, 0
    %v1206 = vsel %vm669, %v1135, 0
    %v1209 = vsel %vm669, %v1136, 0
    %v1212 = vsel %vm669, %v1137, 0
    %v1215 = vsel %vm669, %v1138, 0
    %v1218 = vsel %vm669, %v1139, 0
    %v1221 = vsel %vm669, %v1140, 0
    %v1224 = vsel %vm669, %v1141, 0
    %v1227 = vsel %vm669, %v1142, 0
    %v1230 = vsel %vm669, %v1143, 0
    %v1233 = vsel %vm669, %v1144, 0
    %v1236 = vsel %vm669, %v1145, 0
    %v1239 = vsel %vm669, %v1146, 0
    %v1242 = vsel %vm669, %v1147, 0
    %v1245 = vsel %vm669, %v1148, 0
    %v1248 = vsel %vm669, %v1149, 0
    %v1251 = vsel %vm669, %v1150, 0
    %1253 = vmatprep.subr.bf16.mxu0 0
    %1254 = vmatpush1.bf16.xpose.msra.mxu0 %v1179
    %1255 = vmatprep.subr.bf16.mxu0 0
    %1256 = vmatpush1.bf16.xpose.msra.mxu0 %v1176
    %1257 = vmatprep.subr.bf16.mxu0 0
    %1258 = vmatpush1.bf16.xpose.msra.mxu0 %v1173
    %1259 = vmatprep.subr.bf16.mxu0 0
    %1260 = vmatpush1.bf16.xpose.msra.mxu0 %v1170
    %1261 = vmatprep.subr.bf16.mxu0 0
    %1262 = vmatpush1.bf16.xpose.msra.mxu0 %v1167
    %1263 = vmatprep.subr.bf16.mxu0 0
    %1264 = vmatpush1.bf16.xpose.msra.mxu0 %v1164
    %1265 = vmatprep.subr.bf16.mxu0 0
    %1266 = vmatpush1.bf16.xpose.msra.mxu0 %v1161
    %1267 = vmatprep.subr.bf16.mxu0 0
    %1268 = vmatpush1.bf16.xpose.msra.mxu0 %v1158
    %1269 = vmatprep.subr.bf16.mxu0 0
    %1270 = vmatpush2.bf16.xpose.msra.mxu0 %v1203
    %1271 = vmatprep.subr.bf16.mxu0 0
    %1272 = vmatpush2.bf16.xpose.msra.mxu0 %v1200
    %1273 = vmatprep.subr.bf16.mxu0 0
    %1274 = vmatpush2.bf16.xpose.msra.mxu0 %v1197
    %1275 = vmatprep.subr.bf16.mxu0 0
    %1276 = vmatpush2.bf16.xpose.msra.mxu0 %v1194
    %1277 = vmatprep.subr.bf16.mxu0 0
    %1278 = vmatpush2.bf16.xpose.msra.mxu0 %v1191
    %1279 = vmatprep.subr.bf16.mxu0 0
    %1280 = vmatpush2.bf16.xpose.msra.mxu0 %v1188
    %1281 = vmatprep.subr.bf16.mxu0 0
    %1282 = vmatpush2.bf16.xpose.msra.mxu0 %v1185
    %1283 = vmatprep.subr.bf16.mxu0 0
    %1284 = vmatpush2.bf16.xpose.msra.mxu0 %v1182
    %1285 = vmatprep.mubr.bf16.mxu0 0
    %1286 = vmatmul.mubr.bf16.gmra.mxu0 %v1155
    %v1287 = vpop.f32.mrf.mxu0
    %v1288 = vadd.f32 %v1153, %v1287
    %v1289 = vpop.f32.mrf.mxu0
    %v1290 = vadd.f32 %v1153, %v1289
    %v1291 = vpop.f32.mrf.mxu0
    %v1292 = vpop.f32.mrf.mxu0
    %1293 = vdwg.mxu0
    %1294 = vmatprep.subr.bf16.mxu0 0
    %1295 = vmatpush1.bf16.xpose.msra.mxu0 %v1227
    %1296 = vmatprep.subr.bf16.mxu0 0
    %1297 = vmatpush1.bf16.xpose.msra.mxu0 %v1224
    %1298 = vmatprep.subr.bf16.mxu0 0
    %1299 = vmatpush1.bf16.xpose.msra.mxu0 %v1221
    %1300 = vmatprep.subr.bf16.mxu0 0
    %1301 = vmatpush1.bf16.xpose.msra.mxu0 %v1218
    %1302 = vmatprep.subr.bf16.mxu0 0
    %1303 = vmatpush1.bf16.xpose.msra.mxu0 %v1215
    %1304 = vmatprep.subr.bf16.mxu0 0
    %1305 = vmatpush1.bf16.xpose.msra.mxu0 %v1212
    %1306 = vmatprep.subr.bf16.mxu0 0
    %1307 = vmatpush1.bf16.xpose.msra.mxu0 %v1209
    %1308 = vmatprep.subr.bf16.mxu0 0
    %1309 = vmatpush1.bf16.xpose.msra.mxu0 %v1206
    %1310 = vmatprep.subr.bf16.mxu0 0
    %1311 = vmatpush2.bf16.xpose.msra.mxu0 %v1251
    %1312 = vmatprep.subr.bf16.mxu0 0
    %1313 = vmatpush2.bf16.xpose.msra.mxu0 %v1248
    %1314 = vmatprep.subr.bf16.mxu0 0
    %1315 = vmatpush2.bf16.xpose.msra.mxu0 %v1245
    %1316 = vmatprep.subr.bf16.mxu0 0
    %1317 = vmatpush2.bf16.xpose.msra.mxu0 %v1242
    %1318 = vmatprep.subr.bf16.mxu0 0
    %1319 = vmatpush2.bf16.xpose.msra.mxu0 %v1239
    %1320 = vmatprep.subr.bf16.mxu0 0
    %1321 = vmatpush2.bf16.xpose.msra.mxu0 %v1236
    %1322 = vmatprep.subr.bf16.mxu0 0
    %1323 = vmatpush2.bf16.xpose.msra.mxu0 %v1233
    %1324 = vmatprep.subr.bf16.mxu0 0
    %1325 = vmatpush2.bf16.xpose.msra.mxu0 %v1230
    %1326 = vmatprep.mubr.bf16.mxu0 0
    %1327 = vmatmul.mubr.bf16.gmra.mxu0 %v1155
    %v1328 = vpop.f32.mrf.mxu0
    %v1329 = vadd.f32 %v1153, %v1328
    %v1330 = vpop.f32.mrf.mxu0
    %v1331 = vadd.f32 %v1153, %v1330
    %v1332 = vpop.f32.mrf.mxu0
    %v1333 = vpop.f32.mrf.mxu0
    %1334 = vdwg.mxu0
    %v1339 = vcombine.low %v1288, %v1290
    %v1340 = vcombine.low %v1329, %v1331
    %v1342 = vunpack.c.l.s4 1966171168
    %v1343 = vunpack.c.0.s8 %v1342
    %v1344 = vlaneseq
    %v1345 = vshrl.u32 %v1344, 7
    %v1346 = vsub.s32 %v1343, %v1345
    %v1347 = vrot.slane %v1339, %v1346
    %v1349 = vunpack.c.l.s4 1966171168
    %v1350 = vunpack.c.0.s8 %v1349
    %v1351 = vlaneseq
    %v1352 = vshrl.u32 %v1351, 7
    %v1353 = vsub.s32 %v1350, %v1352
    %v1354 = vrot.slane %v1340, %v1353
    %v1355 = vcombine.low %v1347, %v1354
    %v1357 = vunpack.c.l.s4 1966171168
    %v1358 = vunpack.c.0.s8 %v1357
    %v1359 = vlaneseq
    %v1360 = vshrl.u32 %v1359, 7
    %v1361 = vsub.s32 %v1358, %v1360
    %v1362 = vrot.slane %v1355, %v1361
    %v1364 = vlaneseq
    %vm1365 = vcmp.ge.s32.totalorder %v1364, 0
    %vm1366 = vcmp.lt.s32.totalorder %v1364, 512
    %vm1367 = vmand %vm1365, %vm1366
    %1368 = vst.msk [vmem:[#allocation3] sm:$0xf] %vm1367, %v1362
    // Predicated region
    $region30: #{_critic_forward_impl.1} parent=1 // pred_check
      _
    $region31: #{_critic_forward_impl.1} parent=1 // pred_check_branch
      %1370 = sbr.rel (0) target = $region33
    $region32: #{_critic_forward_impl.1} parent=1 // pred_region
      %s1372 = ssub.s32 64, 64
      %1373 = vsyncadd [#allocation4], %s1372
      %s1375 = sshll.u32 [#allocation3], 4
      %s1376 = int_to_ptr.vmem [resolvable:$true] %s1375
      %1378 = dma.vmem_to_hbm [thread:$0]  %s1376, 64, %s7, [#allocation4]
    $region33: #{_critic_forward_impl.1} parent=1 // pred_fallthru
      _
    // Predicated region
    $region34: #{_critic_forward_impl.1} parent=1 // pred_check
      _
    $region35: #{_critic_forward_impl.1} parent=1 // pred_check_branch
      %1380 = sbr.rel (0) target = $region37
    $region36: #{_critic_forward_impl.1} parent=1 // pred_region
      %1381 = dma.done [#allocation4], 64
    $region37: #{_critic_forward_impl.1} parent=1 // pred_fallthru
      _
    %1382 = vsyncpa [#allocation4], 1

</llo_original>
